<compile_context>
chip_gen: v7x
topology: tpu7x:2x2x1
jax: 0.10.0
libtpu: 0.0.40
codegen_flags: <defaults>
</compile_context>

<pallas_src>
import jax
import jax.numpy as jnp
from jax.experimental import pallas as pl
from jax.experimental.pallas import tpu as pltpu

NEG_SLOPE = 0.01  # torch.nn.LeakyReLU default


def _leaky_relu(x):
    # max form: mul + max (2 VALU ops) instead of cmp + mul + select (3).
    return jnp.maximum(x, NEG_SLOPE * x)


def _round_up(n, m):
    return ((n + m - 1) // m) * m


def _has_bf16_vpu():
    """True on generations with a bf16 VPU path (v6e / v7x)."""
    try:
        kind = jax.devices()[0].device_kind.lower()
    except Exception:
        return False
    return not any(g in kind for g in ("v2", "v3", "v4", "v5"))


def _pick_vmem_limit():
    """Generation-aware scoped-VMEM limit (96 MiB on 128-MiB chips, 48 MiB on v7x)."""
    cap = None
    try:
        cap = getattr(pltpu.get_tpu_info(), "vmem_capacity_bytes", None)
    except Exception:
        cap = None
    if cap is not None and cap >= 100 * 1024 * 1024:
        return 96 * 1024 * 1024
    return 48 * 1024 * 1024


def _make_kernel(nc, tc, compute_dtype):
    """Build the fused MLP kernel for a tile of nc sub-chunks of tc lanes each."""

    def kernel(x_ref, w1_ref, b1_ref, w2_ref, b2_ref, w3_ref, b3_ref, o_ref):
        # x_ref:  (1, nc*tc)  batch on lanes, f32
        # w1_ref: (H, 1) f32   b1_ref: (H, 1) f32
        # w2_ref: (H, H) matmul dtype   b2_ref: (H, 1) f32
        # w3_ref: (1, H) matmul dtype   b3_ref: (1, 1) f32
        # o_ref:  (1, nc*tc) f32
        cd = compute_dtype
        w1 = w1_ref[...].astype(cd)                    # (H, 1)
        b1 = b1_ref[...].astype(cd)                    # (H, 1)
        b2 = b2_ref[...].astype(cd)                    # (H, 1)
        b3 = b3_ref[...]                               # (1, 1) f32
        w2 = w2_ref[...]                               # (H, H)
        w3 = w3_ref[...]                               # (1, H)

        # Static unrolled loop over lane sub-chunks: VPU work of chunk i+1 can
        # schedule under the MXU matmul of chunk i.
        for c in range(nc):
            sl = pl.ds(c * tc, tc)
            x = x_ref[:, sl].astype(cd)                # (1, tc)

            # linear1: in_features == 1 -> broadcasted outer product (VPU).
            h1 = _leaky_relu(w1 * x + b1)              # (H, tc) cd

            # linear2: (H, H) @ (H, tc) on the MXU, f32 accumulation.
            h2 = jnp.dot(w2, h1.astype(w2.dtype),
                         preferred_element_type=jnp.float32)
            h2 = _leaky_relu(h2.astype(cd) + b2)       # (H, tc) cd

            # linear3: out_features == 1 -> fold onto the MXU as (1, H) @ (H, tc).
            # TODO(synk): confirm in the bundle dump that the M=1 result is not
            # padded to (8, tc) with masked stores; if so, use a sublane reduce.
            y = jnp.dot(w3, h2.astype(w3.dtype),
                        preferred_element_type=jnp.float32)  # (1, tc) f32
            o_ref[:, sl] = (y + b3).astype(o_ref.dtype)

    return kernel


def tiny_model_forward(x, params, *, block_n=2048, matmul_dtype=jnp.bfloat16,
                       compute_dtype=None):
    """x: (N, 1) or (N,) float32; params: torch-shaped weights. Returns (N, 1)."""
    x = jnp.asarray(x, jnp.float32).reshape(-1)
    N = int(x.shape[0])
    H = int(params["w1"].shape[0])

    mm_dt = jnp.dtype(matmul_dtype)
    if compute_dtype is None:
        # bf16 elementwise epilogue only where the VPU has a native bf16 path.
        compute_dtype = (jnp.bfloat16
                         if (mm_dt == jnp.dtype(jnp.bfloat16) and _has_bf16_vpu())
                         else jnp.float32)

    # Batch tile: multiple of 128 lanes; clamp to the (padded) batch size.
    tn = _round_up(min(block_n, _round_up(N, 128)), 128)
    n_pad = _round_up(N, tn)
    # Ensure >= 2 grid steps when possible so v7x megacore gets both cores busy.
    if n_pad // tn < 2 and n_pad >= 256:
        tn = max(128, _round_up(n_pad // 2, 128))
        n_pad = _round_up(N, tn)

    # Inner lane sub-chunking for VPU/MXU overlap (2-4 chunks of >=128 lanes).
    nc = 1
    for cand in (4, 2):
        if tn % (cand * 128) == 0 and tn // cand >= 128:
            nc = cand
            break
    tc = tn // nc

    x_row = jnp.pad(x, (0, n_pad - N)).reshape(1, n_pad)        # batch on lanes

    w1_col = params["w1"].reshape(H, 1).astype(jnp.float32)
    b1_col = params["b1"].reshape(H, 1).astype(jnp.float32)
    w2 = params["w2"].astype(matmul_dtype)                      # (H, H), used as W2 @ h1
    b2_col = params["b2"].reshape(H, 1).astype(jnp.float32)
    w3_row = params["w3"].reshape(1, H).astype(matmul_dtype)    # (1, H)
    b3 = params["b3"].reshape(1, 1).astype(jnp.float32)

    grid = (n_pad // tn,)

    # Weights/biases: constant block index, single-buffered (resident, DMA'd once).
    def resident(shape):
        return pl.BlockSpec(shape, lambda i: (0, 0), pipeline_mode=pl.Buffered(1))

    mm_bytes = mm_dt.itemsize
    cost = pl.CostEstimate(
        flops=int(2 * n_pad * H * (H + 2)),
        transcendentals=0,
        bytes_accessed=int(n_pad * 8 + H * H * mm_bytes + H * (mm_bytes + 12) + 4),
    )

    out_row = pl.pallas_call(
        _make_kernel(nc, tc, compute_dtype),
        out_shape=jax.ShapeDtypeStruct((1, n_pad), jnp.float32),
        grid=grid,
        in_specs=[
            pl.BlockSpec((1, tn), lambda i: (0, i)),            # x tile (streams)
            resident((H, 1)),                                   # W1
            resident((H, 1)),                                   # b1
            resident((H, H)),                                   # W2 (single-buffered)
            resident((H, 1)),                                   # b2
            resident((1, H)),                                   # W3
            resident((1, 1)),                                   # b3
        ],
        out_specs=pl.BlockSpec((1, tn), lambda i: (0, i)),      # out tile (streams)
        compiler_params=pltpu.CompilerParams(
            dimension_semantics=("parallel",),                  # megacore on v7x
            vmem_limit_bytes=_pick_vmem_limit(),
        ),
        cost_estimate=cost,
    )(x_row, w1_col, b1_col, w2, b2_col, w3_row, b3)

    return out_row[0, :N].reshape(N, 1)


def make_params(key, hidden):
    """Deterministic parameters with torch.nn.Linear shapes (out, in)."""
    ks = jax.random.split(key, 6)
    scale = 0.1
    return {
        "w1": scale * jax.random.normal(ks[0], (hidden, 1), jnp.float32),
        "b1": scale * jax.random.normal(ks[1], (hidden,), jnp.float32),
        "w2": scale * jax.random.normal(ks[2], (hidden, hidden), jnp.float32),
        "b2": scale * jax.random.normal(ks[3], (hidden,), jnp.float32),
        "w3": scale * jax.random.normal(ks[4], (1, hidden), jnp.float32),
        "b3": scale * jax.random.normal(ks[5], (1,), jnp.float32),
    }


def reference_forward(x, p):
    h1 = _leaky_relu(x @ p["w1"].T + p["b1"])
    h2 = _leaky_relu(h1 @ p["w2"].T + p["b2"])
    return h2 @ p["w3"].T + p["b3"]


if __name__ == "__main__":
    key = jax.random.PRNGKey(0)
    k_x, k_p, k_x2 = jax.random.split(key, 3)

    N, HIDDEN = 8, 128  # small shapes; module default hidden is 1024
    x = jax.random.normal(k_x, (N, 1), jnp.float32)
    params = make_params(k_p, HIDDEN)
    ref = reference_forward(x, params)

    # f32 validation path (tight tolerance)
    out_f32 = jax.block_until_ready(
        tiny_model_forward(x, params, matmul_dtype=jnp.float32))
    assert out_f32.shape == (N, 1)
    assert jnp.allclose(out_f32, ref, atol=1e-4, rtol=1e-4), "f32 kernel mismatch"

    # default path: bf16 matmul weights (f32 accumulation) -- looser tolerance by design
    out_def = jax.block_until_ready(tiny_model_forward(x, params))
    assert out_def.shape == (N, 1)
    assert jnp.allclose(out_def, ref, atol=5e-2, rtol=5e-2), "bf16 kernel mismatch"

    # multi-step grid + batch padding + megacore split + inner chunking (f32, tight)
    N2 = 300
    x2 = jax.random.normal(k_x2, (N2, 1), jnp.float32)
    ref2 = reference_forward(x2, params)
    out2 = jax.block_until_ready(
        tiny_model_forward(x2, params, matmul_dtype=jnp.float32))
    assert out2.shape == (N2, 1)
    assert jnp.allclose(out2, ref2, atol=1e-4, rtol=1e-4), "tiled kernel mismatch"

    # explicit small tile -> 3-step grid, no inner chunking
    out3 = jax.block_until_ready(
        tiny_model_forward(x2, params, block_n=128, matmul_dtype=jnp.float32))
    assert jnp.allclose(out3, ref2, atol=1e-4, rtol=1e-4), "small-tile kernel mismatch"

    print("KERNEL_OK")
</pallas_src>

<mosaic_0001>
module attributes {stable_mosaic.version = 11 : i64} {
  func.func @kernel(%arg0: i32, %arg1: memref<1x128xf32, #tpu.memory_space<vmem>>, %arg2: memref<128x1xf32, #tpu.memory_space<vmem>>, %arg3: memref<128x1xf32, #tpu.memory_space<vmem>>, %arg4: memref<128x128xf32, #tpu.memory_space<vmem>>, %arg5: memref<128x1xf32, #tpu.memory_space<vmem>>, %arg6: memref<1x128xf32, #tpu.memory_space<vmem>>, %arg7: memref<1x1xf32, #tpu.memory_space<vmem>>, %arg8: memref<1x128xf32, #tpu.memory_space<vmem>>) attributes {dimension_semantics = [#tpu.dimension_semantics<parallel>], iteration_bounds = array<i64: 1>, scalar_prefetch = 0 : i64, scratch_operands = 0 : i64, tpu.core_type = #tpu.core_type<tc>, window_params = [{transform_indices = @transform_0, window_bounds = array<i64: 1, 128>}, {pipeline_mode = #tpu.pipeline_mode<synchronous>, transform_indices = @transform_1, window_bounds = array<i64: 128, 1>}, {pipeline_mode = #tpu.pipeline_mode<synchronous>, transform_indices = @transform_2, window_bounds = array<i64: 128, 1>}, {pipeline_mode = #tpu.pipeline_mode<synchronous>, transform_indices = @transform_3, window_bounds = array<i64: 128, 128>}, {pipeline_mode = #tpu.pipeline_mode<synchronous>, transform_indices = @transform_4, window_bounds = array<i64: 128, 1>}, {pipeline_mode = #tpu.pipeline_mode<synchronous>, transform_indices = @transform_5, window_bounds = array<i64: 1, 128>}, {pipeline_mode = #tpu.pipeline_mode<synchronous>, transform_indices = @transform_6, window_bounds = array<i64: 1, 1>}, {transform_indices = @transform_7, window_bounds = array<i64: 1, 128>}]} {
    %c0 = arith.constant 0 : index
    %c0_0 = arith.constant 0 : index
    %0 = vector.load %arg2[%c0, %c0_0] : memref<128x1xf32, #tpu.memory_space<vmem>>, vector<128x1xf32>
    %c0_1 = arith.constant 0 : index
    %c0_2 = arith.constant 0 : index
    %1 = vector.load %arg3[%c0_1, %c0_2] : memref<128x1xf32, #tpu.memory_space<vmem>>, vector<128x1xf32>
    %c0_3 = arith.constant 0 : index
    %c0_4 = arith.constant 0 : index
    %2 = vector.load %arg5[%c0_3, %c0_4] : memref<128x1xf32, #tpu.memory_space<vmem>>, vector<128x1xf32>
    %c0_5 = arith.constant 0 : index
    %c0_6 = arith.constant 0 : index
    %3 = vector.load %arg7[%c0_5, %c0_6] : memref<1x1xf32, #tpu.memory_space<vmem>>, vector<1x1xf32>
    %c0_7 = arith.constant 0 : index
    %c0_8 = arith.constant 0 : index
    %4 = vector.load %arg4[%c0_7, %c0_8] : memref<128x128xf32, #tpu.memory_space<vmem>>, vector<128x128xf32>
    %c0_9 = arith.constant 0 : index
    %c0_10 = arith.constant 0 : index
    %5 = vector.load %arg6[%c0_9, %c0_10] : memref<1x128xf32, #tpu.memory_space<vmem>>, vector<1x128xf32>
    %c0_11 = arith.constant 0 : index
    %c0_12 = arith.constant 0 : index
    %6 = vector.load %arg1[%c0_11, %c0_12] : memref<1x128xf32, #tpu.memory_space<vmem>>, vector<1x128xf32>
    %7 = vector.broadcast %0 : vector<128x1xf32> to vector<128x128xf32>
    %8 = vector.broadcast %6 : vector<1x128xf32> to vector<128x128xf32>
    %9 = arith.mulf %7, %8 : vector<128x128xf32>
    %10 = vector.broadcast %1 : vector<128x1xf32> to vector<128x128xf32>
    %11 = arith.addf %9, %10 : vector<128x128xf32>
    %cst = arith.constant 0.00999999977 : f32
    %12 = vector.broadcast %cst : f32 to vector<128x128xf32>
    %13 = arith.mulf %12, %11 : vector<128x128xf32>
    %14 = arith.maximumf %11, %13 : vector<128x128xf32>
    %cst_13 = arith.constant dense<0.000000e+00> : vector<128x128xf32>
    %15 = tpu.matmul %4, %14, %cst_13 {dimension_numbers = #tpu.dot_dimension_numbers<[1], [0], [0], [1], [0, 0, 1, 1], [], []>} : vector<128x128xf32>, vector<128x128xf32>, vector<128x128xf32> -> vector<128x128xf32>
    %16 = vector.broadcast %2 : vector<128x1xf32> to vector<128x128xf32>
    %17 = arith.addf %15, %16 : vector<128x128xf32>
    %cst_14 = arith.constant 0.00999999977 : f32
    %18 = vector.broadcast %cst_14 : f32 to vector<128x128xf32>
    %19 = arith.mulf %18, %17 : vector<128x128xf32>
    %20 = arith.maximumf %17, %19 : vector<128x128xf32>
    %cst_15 = arith.constant dense<0.000000e+00> : vector<1x128xf32>
    %21 = tpu.matmul %5, %20, %cst_15 {dimension_numbers = #tpu.dot_dimension_numbers<[1], [0], [0], [1], [0, 0, 1, 1], [], []>} : vector<1x128xf32>, vector<128x128xf32>, vector<1x128xf32> -> vector<1x128xf32>
    %22 = vector.broadcast %3 : vector<1x1xf32> to vector<1x128xf32>
    %23 = arith.addf %21, %22 : vector<1x128xf32>
    %c0_16 = arith.constant 0 : index
    %c0_17 = arith.constant 0 : index
    %24 = vector.load %arg8[%c0_16, %c0_17] : memref<1x128xf32, #tpu.memory_space<vmem>>, vector<1x128xf32>
    tpu.vector_store %arg8[%c0_16, %c0_17], %23 {strides = array<i32>} : memref<1x128xf32, #tpu.memory_space<vmem>>, vector<1x128xf32>,
    return
  }
  func.func @transform_0(%arg0: i32) -> (i32, i32) {
    %c0_i32 = arith.constant 0 : i32
    %c0_i32_0 = arith.constant 0 : i32
    return %c0_i32, %arg0 : i32, i32
  }
  func.func @transform_1(%arg0: i32) -> (i32, i32) {
    %c0_i32 = arith.constant 0 : i32
    %c0_i32_0 = arith.constant 0 : i32
    %c0_i32_1 = arith.constant 0 : i32
    return %c0_i32, %c0_i32_0 : i32, i32
  }
  func.func @transform_2(%arg0: i32) -> (i32, i32) {
    %c0_i32 = arith.constant 0 : i32
    %c0_i32_0 = arith.constant 0 : i32
    %c0_i32_1 = arith.constant 0 : i32
    return %c0_i32, %c0_i32_0 : i32, i32
  }
  func.func @transform_3(%arg0: i32) -> (i32, i32) {
    %c0_i32 = arith.constant 0 : i32
    %c0_i32_0 = arith.constant 0 : i32
    %c0_i32_1 = arith.constant 0 : i32
    return %c0_i32, %c0_i32_0 : i32, i32
  }
  func.func @transform_4(%arg0: i32) -> (i32, i32) {
    %c0_i32 = arith.constant 0 : i32
    %c0_i32_0 = arith.constant 0 : i32
    %c0_i32_1 = arith.constant 0 : i32
    return %c0_i32, %c0_i32_0 : i32, i32
  }
  func.func @transform_5(%arg0: i32) -> (i32, i32) {
    %c0_i32 = arith.constant 0 : i32
    %c0_i32_0 = arith.constant 0 : i32
    %c0_i32_1 = arith.constant 0 : i32
    return %c0_i32, %c0_i32_0 : i32, i32
  }
  func.func @transform_6(%arg0: i32) -> (i32, i32) {
    %c0_i32 = arith.constant 0 : i32
    %c0_i32_0 = arith.constant 0 : i32
    %c0_i32_1 = arith.constant 0 : i32
    return %c0_i32, %c0_i32_0 : i32, i32
  }
  func.func @transform_7(%arg0: i32) -> (i32, i32) {
    %c0_i32 = arith.constant 0 : i32
    %c0_i32_0 = arith.constant 0 : i32
    return %c0_i32, %arg0 : i32, i32
  }
}

</mosaic_0001>

<llo_original>
// kernel: tpu_custom_call.1
$region0: #{tpu_custom_call.1}
  #allocation0 [shape = 'u32[]', space=smem, size = 0x4, offset = 0x4, fixed_abs, tag = 'smem constant byte address 0x4 - core index']
  #allocation1 [shape = 'u32[144,128]{1,0:T(1,128)}', space=vmem, size = 0x12000, scoped, tag = 'internal scratch']
  #allocation2 [shape = 'f32[1,1]{1,0:T(1,128)S(1)}', space=vmem, size = 0x200, scoped, tag = 'scoped memory for tpu_custom_call.1']
  %s0 = inlined_call_operand.vmem [shape: f32[1,128], index: 0, kind: input, shape index: {}]
  %s1 = inlined_call_operand.vmem [shape: f32[128,1], index: 1, kind: input, shape index: {}]
  %s2 = inlined_call_operand.vmem [shape: f32[128,1], index: 2, kind: input, shape index: {}]
  %s3 = inlined_call_operand.vmem [shape: f32[128,128], index: 3, kind: input, shape index: {}]
  %s4 = inlined_call_operand.vmem [shape: f32[128,1], index: 4, kind: input, shape index: {}]
  %s5 = inlined_call_operand.vmem [shape: f32[1,128], index: 5, kind: input, shape index: {}]
  %s6 = inlined_call_operand.<no memory space> [shape: f32[1,1], index: 6, kind: input, shape index: {}]
  %s7 = inlined_call_operand.hbm [shape: f32[1,128], index: 7, kind: output, shape index: {}]
  %s8 = sld [smem:[#allocation0]]
  $region38: #{tpu_custom_call.1} parent=0
    _
  %s10 = ssub.s32 1, %s8
  %s11 = scalar_select 0, %s10, %s8
  %v12 = vstv %s6
  %13 = vst [vmem:[#allocation2] sm:$0x1] %v12
  $region1: #{tpu_custom_call.1} parent=0
    #allocation3 [shape = 'u8[512]{0}', space=vmem, size = 0x400, scoped, tag = 'output window, operand 0, single buffered']
    #allocation4 [shape = 's32[1]{0}', space=sflag, size = 0x4, scoped, tag = 'scoped memory for tpu_custom_call.1']
    %14 = vsyncpa [#allocation4], 0
    // Predicated region
    $region2: #{tpu_custom_call.1} parent=1 // pred_check
      _
    $region3: #{tpu_custom_call.1} parent=1 // pred_check_branch
      %16 = sbr.rel (0) target = $region5
    $region4: #{tpu_custom_call.1} parent=1 // pred_region
      _
    $region5: #{tpu_custom_call.1} parent=1 // pred_fallthru
      _
    // Predicated region
    $region6: #{tpu_custom_call.1} parent=1 // pred_check
      _
    $region7: #{tpu_custom_call.1} parent=1 // pred_check_branch
      %18 = sbr.rel (0) target = $region9
    $region8: #{tpu_custom_call.1} parent=1 // pred_region
      _
    $region9: #{tpu_custom_call.1} parent=1 // pred_fallthru
      _
    // Predicated region
    $region10: #{tpu_custom_call.1} parent=1 // pred_check
      _
    $region11: #{tpu_custom_call.1} parent=1 // pred_check_branch
      %20 = sbr.rel (0) target = $region13
    $region12: #{tpu_custom_call.1} parent=1 // pred_region
      _
    $region13: #{tpu_custom_call.1} parent=1 // pred_fallthru
      _
    // Predicated region
    $region14: #{tpu_custom_call.1} parent=1 // pred_check
      _
    $region15: #{tpu_custom_call.1} parent=1 // pred_check_branch
      %22 = sbr.rel (0) target = $region17
    $region16: #{tpu_custom_call.1} parent=1 // pred_region
      _
    $region17: #{tpu_custom_call.1} parent=1 // pred_fallthru
      _
    // Predicated region
    $region18: #{tpu_custom_call.1} parent=1 // pred_check
      _
    $region19: #{tpu_custom_call.1} parent=1 // pred_check_branch
      %24 = sbr.rel (0) target = $region21
    $region20: #{tpu_custom_call.1} parent=1 // pred_region
      _
    $region21: #{tpu_custom_call.1} parent=1 // pred_fallthru
      _
    // Predicated region
    $region22: #{tpu_custom_call.1} parent=1 // pred_check
      _
    $region23: #{tpu_custom_call.1} parent=1 // pred_check_branch
      %26 = sbr.rel (0) target = $region25
    $region24: #{tpu_custom_call.1} parent=1 // pred_region
      _
    $region25: #{tpu_custom_call.1} parent=1 // pred_fallthru
      _
    // Predicated region
    $region26: #{tpu_custom_call.1} parent=1 // pred_check
      _
    $region27: #{tpu_custom_call.1} parent=1 // pred_check_branch
      %28 = sbr.rel (0) target = $region29
    $region28: #{tpu_custom_call.1} parent=1 // pred_region
      _
    $region29: #{tpu_custom_call.1} parent=1 // pred_fallthru
      _
    %v29 = vld [vmem:[%s1] sm:$0xff]
    %v30 = vld [vmem:[%s1 + $0x8] sm:$0xff]
    %v31 = vld [vmem:[%s1 + $0x10] sm:$0xff]
    %v32 = vld [vmem:[%s1 + $0x18] sm:$0xff]
    %v33 = vld [vmem:[%s1 + $0x20] sm:$0xff]
    %v34 = vld [vmem:[%s1 + $0x28] sm:$0xff]
    %v35 = vld [vmem:[%s1 + $0x30] sm:$0xff]
    %v36 = vld [vmem:[%s1 + $0x38] sm:$0xff]
    %v37 = vld [vmem:[%s1 + $0x40] sm:$0xff]
    %v38 = vld [vmem:[%s1 + $0x48] sm:$0xff]
    %v39 = vld [vmem:[%s1 + $0x50] sm:$0xff]
    %v40 = vld [vmem:[%s1 + $0x58] sm:$0xff]
    %v41 = vld [vmem:[%s1 + $0x60] sm:$0xff]
    %v42 = vld [vmem:[%s1 + $0x68] sm:$0xff]
    %v43 = vld [vmem:[%s1 + $0x70] sm:$0xff]
    %v44 = vld [vmem:[%s1 + $0x78] sm:$0xff]
    %v45 = vld [vmem:[%s2] sm:$0xff]
    %v46 = vld [vmem:[%s2 + $0x8] sm:$0xff]
    %v47 = vld [vmem:[%s2 + $0x10] sm:$0xff]
    %v48 = vld [vmem:[%s2 + $0x18] sm:$0xff]
    %v49 = vld [vmem:[%s2 + $0x20] sm:$0xff]
    %v50 = vld [vmem:[%s2 + $0x28] sm:$0xff]
    %v51 = vld [vmem:[%s2 + $0x30] sm:$0xff]
    %v52 = vld [vmem:[%s2 + $0x38] sm:$0xff]
    %v53 = vld [vmem:[%s2 + $0x40] sm:$0xff]
    %v54 = vld [vmem:[%s2 + $0x48] sm:$0xff]
    %v55 = vld [vmem:[%s2 + $0x50] sm:$0xff]
    %v56 = vld [vmem:[%s2 + $0x58] sm:$0xff]
    %v57 = vld [vmem:[%s2 + $0x60] sm:$0xff]
    %v58 = vld [vmem:[%s2 + $0x68] sm:$0xff]
    %v59 = vld [vmem:[%s2 + $0x70] sm:$0xff]
    %v60 = vld [vmem:[%s2 + $0x78] sm:$0xff]
    %v61 = vld [vmem:[%s4] sm:$0xff]
    %v62 = vld [vmem:[%s4 + $0x8] sm:$0xff]
    %v63 = vld [vmem:[%s4 + $0x10] sm:$0xff]
    %v64 = vld [vmem:[%s4 + $0x18] sm:$0xff]
    %v65 = vld [vmem:[%s4 + $0x20] sm:$0xff]
    %v66 = vld [vmem:[%s4 + $0x28] sm:$0xff]
    %v67 = vld [vmem:[%s4 + $0x30] sm:$0xff]
    %v68 = vld [vmem:[%s4 + $0x38] sm:$0xff]
    %v69 = vld [vmem:[%s4 + $0x40] sm:$0xff]
    %v70 = vld [vmem:[%s4 + $0x48] sm:$0xff]
    %v71 = vld [vmem:[%s4 + $0x50] sm:$0xff]
    %v72 = vld [vmem:[%s4 + $0x58] sm:$0xff]
    %v73 = vld [vmem:[%s4 + $0x60] sm:$0xff]
    %v74 = vld [vmem:[%s4 + $0x68] sm:$0xff]
    %v75 = vld [vmem:[%s4 + $0x70] sm:$0xff]
    %v76 = vld [vmem:[%s4 + $0x78] sm:$0xff]
    %v77 = vld [vmem:[#allocation2] sm:$0x1]
    %v78 = vld [vmem:[%s3] sm:$0xff]
    %v79 = vld [vmem:[%s3 + $0x8] sm:$0xff]
    %v80 = vld [vmem:[%s3 + $0x10] sm:$0xff]
    %v81 = vld [vmem:[%s3 + $0x18] sm:$0xff]
    %v82 = vld [vmem:[%s3 + $0x20] sm:$0xff]
    %v83 = vld [vmem:[%s3 + $0x28] sm:$0xff]
    %v84 = vld [vmem:[%s3 + $0x30] sm:$0xff]
    %v85 = vld [vmem:[%s3 + $0x38] sm:$0xff]
    %v86 = vld [vmem:[%s3 + $0x40] sm:$0xff]
    %v87 = vld [vmem:[%s3 + $0x48] sm:$0xff]
    %v88 = vld [vmem:[%s3 + $0x50] sm:$0xff]
    %v89 = vld [vmem:[%s3 + $0x58] sm:$0xff]
    %v90 = vld [vmem:[%s3 + $0x60] sm:$0xff]
    %v91 = vld [vmem:[%s3 + $0x68] sm:$0xff]
    %v92 = vld [vmem:[%s3 + $0x70] sm:$0xff]
    %v93 = vld [vmem:[%s3 + $0x78] sm:$0xff]
    %v94 = vld [vmem:[%s5] sm:$0x1]
    %v95 = vld [vmem:[%s0] sm:$0x1]
    %97 = vset.pattern.permute.xlu0 0
    %98 = vperm.xlu0 %97, %v29
    %v99 = vpop.permute.xlu0 %98
    %102 = vset.pattern.permute.xlu0 0
    %103 = vperm.xlu0 %102, %v30
    %v104 = vpop.permute.xlu0 %103
    %107 = vset.pattern.permute.xlu0 0
    %108 = vperm.xlu0 %107, %v31
    %v109 = vpop.permute.xlu0 %108
    %112 = vset.pattern.permute.xlu0 0
    %113 = vperm.xlu0 %112, %v32
    %v114 = vpop.permute.xlu0 %113
    %117 = vset.pattern.permute.xlu0 0
    %118 = vperm.xlu0 %117, %v33
    %v119 = vpop.permute.xlu0 %118
    %122 = vset.pattern.permute.xlu0 0
    %123 = vperm.xlu0 %122, %v34
    %v124 = vpop.permute.xlu0 %123
    %127 = vset.pattern.permute.xlu0 0
    %128 = vperm.xlu0 %127, %v35
    %v129 = vpop.permute.xlu0 %128
    %132 = vset.pattern.permute.xlu0 0
    %133 = vperm.xlu0 %132, %v36
    %v134 = vpop.permute.xlu0 %133
    %137 = vset.pattern.permute.xlu0 0
    %138 = vperm.xlu0 %137, %v37
    %v139 = vpop.permute.xlu0 %138
    %142 = vset.pattern.permute.xlu0 0
    %143 = vperm.xlu0 %142, %v38
    %v144 = vpop.permute.xlu0 %143
    %147 = vset.pattern.permute.xlu0 0
    %148 = vperm.xlu0 %147, %v39
    %v149 = vpop.permute.xlu0 %148
    %152 = vset.pattern.permute.xlu0 0
    %153 = vperm.xlu0 %152, %v40
    %v154 = vpop.permute.xlu0 %153
    %157 = vset.pattern.permute.xlu0 0
    %158 = vperm.xlu0 %157, %v41
    %v159 = vpop.permute.xlu0 %158
    %162 = vset.pattern.permute.xlu0 0
    %163 = vperm.xlu0 %162, %v42
    %v164 = vpop.permute.xlu0 %163
    %167 = vset.pattern.permute.xlu0 0
    %168 = vperm.xlu0 %167, %v43
    %v169 = vpop.permute.xlu0 %168
    %172 = vset.pattern.permute.xlu0 0
    %173 = vperm.xlu0 %172, %v44
    %v174 = vpop.permute.xlu0 %173
    %v177 = vlaneseq
    %v178 = vshrl.u32 %v177, 7
    %v179 = vsub.s32 0, %v178
    %v180 = vrot.slane %v95, %v179
    %v182 = vmul.f32 %v99, %v180
    %v183 = vmul.f32 %v104, %v180
    %v184 = vmul.f32 %v109, %v180
    %v185 = vmul.f32 %v114, %v180
    %v186 = vmul.f32 %v119, %v180
    %v187 = vmul.f32 %v124, %v180
    %v188 = vmul.f32 %v129, %v180
    %v189 = vmul.f32 %v134, %v180
    %v190 = vmul.f32 %v139, %v180
    %v191 = vmul.f32 %v144, %v180
    %v192 = vmul.f32 %v149, %v180
    %v193 = vmul.f32 %v154, %v180
    %v194 = vmul.f32 %v159, %v180
    %v195 = vmul.f32 %v164, %v180
    %v196 = vmul.f32 %v169, %v180
    %v197 = vmul.f32 %v174, %v180
    %199 = vset.pattern.permute.xlu0 0
    %200 = vperm.xlu0 %199, %v45
    %v201 = vpop.permute.xlu0 %200
    %204 = vset.pattern.permute.xlu0 0
    %205 = vperm.xlu0 %204, %v46
    %v206 = vpop.permute.xlu0 %205
    %209 = vset.pattern.permute.xlu0 0
    %210 = vperm.xlu0 %209, %v47
    %v211 = vpop.permute.xlu0 %210
    %214 = vset.pattern.permute.xlu0 0
    %215 = vperm.xlu0 %214, %v48
    %v216 = vpop.permute.xlu0 %215
    %219 = vset.pattern.permute.xlu0 0
    %220 = vperm.xlu0 %219, %v49
    %v221 = vpop.permute.xlu0 %220
    %224 = vset.pattern.permute.xlu0 0
    %225 = vperm.xlu0 %224, %v50
    %v226 = vpop.permute.xlu0 %225
    %229 = vset.pattern.permute.xlu0 0
    %230 = vperm.xlu0 %229, %v51
    %v231 = vpop.permute.xlu0 %230
    %234 = vset.pattern.permute.xlu0 0
    %235 = vperm.xlu0 %234, %v52
    %v236 = vpop.permute.xlu0 %235
    %239 = vset.pattern.permute.xlu0 0
    %240 = vperm.xlu0 %239, %v53
    %v241 = vpop.permute.xlu0 %240
    %244 = vset.pattern.permute.xlu0 0
    %245 = vperm.xlu0 %244, %v54
    %v246 = vpop.permute.xlu0 %245
    %249 = vset.pattern.permute.xlu0 0
    %250 = vperm.xlu0 %249, %v55
    %v251 = vpop.permute.xlu0 %250
    %254 = vset.pattern.permute.xlu0 0
    %255 = vperm.xlu0 %254, %v56
    %v256 = vpop.permute.xlu0 %255
    %259 = vset.pattern.permute.xlu0 0
    %260 = vperm.xlu0 %259, %v57
    %v261 = vpop.permute.xlu0 %260
    %264 = vset.pattern.permute.xlu0 0
    %265 = vperm.xlu0 %264, %v58
    %v266 = vpop.permute.xlu0 %265
    %269 = vset.pattern.permute.xlu0 0
    %270 = vperm.xlu0 %269, %v59
    %v271 = vpop.permute.xlu0 %270
    %274 = vset.pattern.permute.xlu0 0
    %275 = vperm.xlu0 %274, %v60
    %v276 = vpop.permute.xlu0 %275
    %v278 = vadd.f32 %v182, %v201
    %v279 = vadd.f32 %v183, %v206
    %v280 = vadd.f32 %v184, %v211
    %v281 = vadd.f32 %v185, %v216
    %v282 = vadd.f32 %v186, %v221
    %v283 = vadd.f32 %v187, %v226
    %v284 = vadd.f32 %v188, %v231
    %v285 = vadd.f32 %v189, %v236
    %v286 = vadd.f32 %v190, %v241
    %v287 = vadd.f32 %v191, %v246
    %v288 = vadd.f32 %v192, %v251
    %v289 = vadd.f32 %v193, %v256
    %v290 = vadd.f32 %v194, %v261
    %v291 = vadd.f32 %v195, %v266
    %v292 = vadd.f32 %v196, %v271
    %v293 = vadd.f32 %v197, %v276
    %v294 = vmul.f32 %v278, 0.01
    %v295 = vmul.f32 %v279, 0.01
    %v296 = vmul.f32 %v280, 0.01
    %v297 = vmul.f32 %v281, 0.01
    %v298 = vmul.f32 %v282, 0.01
    %v299 = vmul.f32 %v283, 0.01
    %v300 = vmul.f32 %v284, 0.01
    %v301 = vmul.f32 %v285, 0.01
    %v302 = vmul.f32 %v286, 0.01
    %v303 = vmul.f32 %v287, 0.01
    %v304 = vmul.f32 %v288, 0.01
    %v305 = vmul.f32 %v289, 0.01
    %v306 = vmul.f32 %v290, 0.01
    %v307 = vmul.f32 %v291, 0.01
    %v308 = vmul.f32 %v292, 0.01
    %v309 = vmul.f32 %v293, 0.01
    %v310 = vmax.f32 %v278, %v294
    %v311 = vmax.f32 %v279, %v295
    %v312 = vmax.f32 %v280, %v296
    %v313 = vmax.f32 %v281, %v297
    %v314 = vmax.f32 %v282, %v298
    %v315 = vmax.f32 %v283, %v299
    %v316 = vmax.f32 %v284, %v300
    %v317 = vmax.f32 %v285, %v301
    %v318 = vmax.f32 %v286, %v302
    %v319 = vmax.f32 %v287, %v303
    %v320 = vmax.f32 %v288, %v304
    %v321 = vmax.f32 %v289, %v305
    %v322 = vmax.f32 %v290, %v306
    %v323 = vmax.f32 %v291, %v307
    %v324 = vmax.f32 %v292, %v308
    %v325 = vmax.f32 %v293, %v309
    %327 = vset.pattern.permute.xlu0 0
    %328 = vperm.xlu0 %327, %v61
    %v329 = vpop.permute.xlu0 %328
    %332 = vset.pattern.permute.xlu0 0
    %333 = vperm.xlu0 %332, %v62
    %v334 = vpop.permute.xlu0 %333
    %337 = vset.pattern.permute.xlu0 0
    %338 = vperm.xlu0 %337, %v63
    %v339 = vpop.permute.xlu0 %338
    %342 = vset.pattern.permute.xlu0 0
    %343 = vperm.xlu0 %342, %v64
    %v344 = vpop.permute.xlu0 %343
    %347 = vset.pattern.permute.xlu0 0
    %348 = vperm.xlu0 %347, %v65
    %v349 = vpop.permute.xlu0 %348
    %352 = vset.pattern.permute.xlu0 0
    %353 = vperm.xlu0 %352, %v66
    %v354 = vpop.permute.xlu0 %353
    %357 = vset.pattern.permute.xlu0 0
    %358 = vperm.xlu0 %357, %v67
    %v359 = vpop.permute.xlu0 %358
    %362 = vset.pattern.permute.xlu0 0
    %363 = vperm.xlu0 %362, %v68
    %v364 = vpop.permute.xlu0 %363
    %367 = vset.pattern.permute.xlu0 0
    %368 = vperm.xlu0 %367, %v69
    %v369 = vpop.permute.xlu0 %368
    %372 = vset.pattern.permute.xlu0 0
    %373 = vperm.xlu0 %372, %v70
    %v374 = vpop.permute.xlu0 %373
    %377 = vset.pattern.permute.xlu0 0
    %378 = vperm.xlu0 %377, %v71
    %v379 = vpop.permute.xlu0 %378
    %382 = vset.pattern.permute.xlu0 0
    %383 = vperm.xlu0 %382, %v72
    %v384 = vpop.permute.xlu0 %383
    %387 = vset.pattern.permute.xlu0 0
    %388 = vperm.xlu0 %387, %v73
    %v389 = vpop.permute.xlu0 %388
    %392 = vset.pattern.permute.xlu0 0
    %393 = vperm.xlu0 %392, %v74
    %v394 = vpop.permute.xlu0 %393
    %397 = vset.pattern.permute.xlu0 0
    %398 = vperm.xlu0 %397, %v75
    %v399 = vpop.permute.xlu0 %398
    %402 = vset.pattern.permute.xlu0 0
    %403 = vperm.xlu0 %402, %v76
    %v404 = vpop.permute.xlu0 %403
    %406 = vmatprep.subr.mxu0 0.0
    %407 = vmatpush1.msra.mxu0 %v310
    %408 = vmatprep.subr.mxu0 0.0
    %409 = vmatpush1.msra.mxu0 %v311
    %410 = vmatprep.subr.mxu0 0.0
    %411 = vmatpush1.msra.mxu0 %v312
    %412 = vmatprep.subr.mxu0 0.0
    %413 = vmatpush1.msra.mxu0 %v313
    %414 = vmatprep.subr.mxu0 0.0
    %415 = vmatpush1.msra.mxu0 %v314
    %416 = vmatprep.subr.mxu0 0.0
    %417 = vmatpush1.msra.mxu0 %v315
    %418 = vmatprep.subr.mxu0 0.0
    %419 = vmatpush1.msra.mxu0 %v316
    %420 = vmatprep.subr.mxu0 0.0
    %421 = vmatpush1.msra.mxu0 %v317
    %422 = vmatprep.subr.mxu0 0.0
    %423 = vmatpush1.msra.mxu0 %v318
    %424 = vmatprep.subr.mxu0 0.0
    %425 = vmatpush1.msra.mxu0 %v319
    %426 = vmatprep.subr.mxu0 0.0
    %427 = vmatpush1.msra.mxu0 %v320
    %428 = vmatprep.subr.mxu0 0.0
    %429 = vmatpush1.msra.mxu0 %v321
    %430 = vmatprep.subr.mxu0 0.0
    %431 = vmatpush1.msra.mxu0 %v322
    %432 = vmatprep.subr.mxu0 0.0
    %433 = vmatpush1.msra.mxu0 %v323
    %434 = vmatprep.subr.mxu0 0.0
    %435 = vmatpush1.msra.mxu0 %v324
    %436 = vmatprep.subr.mxu0 0.0
    %437 = vmatpush1.msra.mxu0 %v325
    %438 = vmatprep.subr.mxu0 0.0
    %439 = vmatpush1.msra.mxu0 0.0
    %440 = vmatprep.subr.mxu0 0.0
    %441 = vmatpush1.msra.mxu0 0.0
    %442 = vmatprep.subr.mxu0 0.0
    %443 = vmatpush1.msra.mxu0 0.0
    %444 = vmatprep.subr.mxu0 0.0
    %445 = vmatpush1.msra.mxu0 0.0
    %446 = vmatprep.subr.mxu0 0.0
    %447 = vmatpush1.msra.mxu0 0.0
    %448 = vmatprep.subr.mxu0 0.0
    %449 = vmatpush1.msra.mxu0 0.0
    %450 = vmatprep.subr.mxu0 0.0
    %451 = vmatpush1.msra.mxu0 0.0
    %452 = vmatprep.subr.mxu0 0.0
    %453 = vmatpush1.msra.mxu0 0.0
    %454 = vmatprep.subr.mxu0 0.0
    %455 = vmatpush1.msra.mxu0 0.0
    %456 = vmatprep.subr.mxu0 0.0
    %457 = vmatpush1.msra.mxu0 0.0
    %458 = vmatprep.subr.mxu0 0.0
    %459 = vmatpush1.msra.mxu0 0.0
    %460 = vmatprep.subr.mxu0 0.0
    %461 = vmatpush1.msra.mxu0 0.0
    %462 = vmatprep.subr.mxu0 0.0
    %463 = vmatpush1.msra.mxu0 0.0
    %464 = vmatprep.subr.mxu0 0.0
    %465 = vmatpush1.msra.mxu0 0.0
    %466 = vmatprep.subr.mxu0 0.0
    %467 = vmatpush1.msra.mxu0 0.0
    %468 = vmatprep.subr.mxu0 0.0
    %469 = vmatpush1.msra.mxu0 0.0
    %470 = vmatprep.mubr.f32.mxu0 0.0
    %471 = vmatmul.mubr.f32.gmra.mrb[0].mxu0 %v78
    %v472 = vpop.f32.mrb[0].mxu0
    %v473 = vadd.f32 %v329, %v472
    %v474 = vpop.f32.mrb[0].mxu0
    %475 = vmatprep.mubr.f32.mxu0 0.0
    %476 = vmatmul.mubr.f32.gmra.mrb[0].mxu0 %v79
    %v477 = vpop.f32.mrb[0].mxu0
    %v478 = vadd.f32 %v334, %v477
    %v479 = vpop.f32.mrb[0].mxu0
    %480 = vmatprep.mubr.f32.mxu0 0.0
    %481 = vmatmul.mubr.f32.gmra.mrb[0].mxu0 %v80
    %v482 = vpop.f32.mrb[0].mxu0
    %v483 = vadd.f32 %v339, %v482
    %v484 = vpop.f32.mrb[0].mxu0
    %485 = vmatprep.mubr.f32.mxu0 0.0
    %486 = vmatmul.mubr.f32.gmra.mrb[0].mxu0 %v81
    %v487 = vpop.f32.mrb[0].mxu0
    %v488 = vadd.f32 %v344, %v487
    %v489 = vpop.f32.mrb[0].mxu0
    %490 = vmatprep.mubr.f32.mxu0 0.0
    %491 = vmatmul.mubr.f32.gmra.mrb[0].mxu0 %v82
    %v492 = vpop.f32.mrb[0].mxu0
    %v493 = vadd.f32 %v349, %v492
    %v494 = vpop.f32.mrb[0].mxu0
    %495 = vmatprep.mubr.f32.mxu0 0.0
    %496 = vmatmul.mubr.f32.gmra.mrb[0].mxu0 %v83
    %v497 = vpop.f32.mrb[0].mxu0
    %v498 = vadd.f32 %v354, %v497
    %v499 = vpop.f32.mrb[0].mxu0
    %500 = vmatprep.mubr.f32.mxu0 0.0
    %501 = vmatmul.mubr.f32.gmra.mrb[0].mxu0 %v84
    %v502 = vpop.f32.mrb[0].mxu0
    %v503 = vadd.f32 %v359, %v502
    %v504 = vpop.f32.mrb[0].mxu0
    %505 = vmatprep.mubr.f32.mxu0 0.0
    %506 = vmatmul.mubr.f32.gmra.mrb[0].mxu0 %v85
    %v507 = vpop.f32.mrb[0].mxu0
    %v508 = vadd.f32 %v364, %v507
    %v509 = vpop.f32.mrb[0].mxu0
    %510 = vmatprep.mubr.f32.mxu0 0.0
    %511 = vmatmul.mubr.f32.gmra.mrb[0].mxu0 %v86
    %v512 = vpop.f32.mrb[0].mxu0
    %v513 = vadd.f32 %v369, %v512
    %v514 = vpop.f32.mrb[0].mxu0
    %515 = vmatprep.mubr.f32.mxu0 0.0
    %516 = vmatmul.mubr.f32.gmra.mrb[0].mxu0 %v87
    %v517 = vpop.f32.mrb[0].mxu0
    %v518 = vadd.f32 %v374, %v517
    %v519 = vpop.f32.mrb[0].mxu0
    %520 = vmatprep.mubr.f32.mxu0 0.0
    %521 = vmatmul.mubr.f32.gmra.mrb[0].mxu0 %v88
    %v522 = vpop.f32.mrb[0].mxu0
    %v523 = vadd.f32 %v379, %v522
    %v524 = vpop.f32.mrb[0].mxu0
    %525 = vmatprep.mubr.f32.mxu0 0.0
    %526 = vmatmul.mubr.f32.gmra.mrb[0].mxu0 %v89
    %v527 = vpop.f32.mrb[0].mxu0
    %v528 = vadd.f32 %v384, %v527
    %v529 = vpop.f32.mrb[0].mxu0
    %530 = vmatprep.mubr.f32.mxu0 0.0
    %531 = vmatmul.mubr.f32.gmra.mrb[0].mxu0 %v90
    %v532 = vpop.f32.mrb[0].mxu0
    %v533 = vadd.f32 %v389, %v532
    %v534 = vpop.f32.mrb[0].mxu0
    %535 = vmatprep.mubr.f32.mxu0 0.0
    %536 = vmatmul.mubr.f32.gmra.mrb[0].mxu0 %v91
    %v537 = vpop.f32.mrb[0].mxu0
    %v538 = vadd.f32 %v394, %v537
    %v539 = vpop.f32.mrb[0].mxu0
    %540 = vmatprep.mubr.f32.mxu0 0.0
    %541 = vmatmul.mubr.f32.gmra.mrb[0].mxu0 %v92
    %v542 = vpop.f32.mrb[0].mxu0
    %v543 = vadd.f32 %v399, %v542
    %v544 = vpop.f32.mrb[0].mxu0
    %545 = vmatprep.mubr.f32.mxu0 0.0
    %546 = vmatmul.mubr.f32.gmra.mrb[0].mxu0 %v93
    %v547 = vpop.f32.mrb[0].mxu0
    %v548 = vadd.f32 %v404, %v547
    %v549 = vpop.f32.mrb[0].mxu0
    %550 = vdwg.mxu0
    %v551 = vmul.f32 %v473, 0.01
    %v552 = vmul.f32 %v478, 0.01
    %v553 = vmul.f32 %v483, 0.01
    %v554 = vmul.f32 %v488, 0.01
    %v555 = vmul.f32 %v493, 0.01
    %v556 = vmul.f32 %v498, 0.01
    %v557 = vmul.f32 %v503, 0.01
    %v558 = vmul.f32 %v508, 0.01
    %v559 = vmul.f32 %v513, 0.01
    %v560 = vmul.f32 %v518, 0.01
    %v561 = vmul.f32 %v523, 0.01
    %v562 = vmul.f32 %v528, 0.01
    %v563 = vmul.f32 %v533, 0.01
    %v564 = vmul.f32 %v538, 0.01
    %v565 = vmul.f32 %v543, 0.01
    %v566 = vmul.f32 %v548, 0.01
    %v567 = vmax.f32 %v473, %v551
    %v568 = vmax.f32 %v478, %v552
    %v569 = vmax.f32 %v483, %v553
    %v570 = vmax.f32 %v488, %v554
    %v571 = vmax.f32 %v493, %v555
    %v572 = vmax.f32 %v498, %v556
    %v573 = vmax.f32 %v503, %v557
    %v574 = vmax.f32 %v508, %v558
    %v575 = vmax.f32 %v513, %v559
    %v576 = vmax.f32 %v518, %v560
    %v577 = vmax.f32 %v523, %v561
    %v578 = vmax.f32 %v528, %v562
    %v579 = vmax.f32 %v533, %v563
    %v580 = vmax.f32 %v538, %v564
    %v581 = vmax.f32 %v543, %v565
    %v582 = vmax.f32 %v548, %v566
    %584 = vset.pattern.permute.xlu0 0
    %585 = vperm.xlu0 %584, %v77
    %v586 = vpop.permute.xlu0 %585
    %v588 = vlaneseq
    %v589 = vshrl.u32 %v588, 7
    %v590 = vsub.s32 0, %v589
    %v591 = vrot.slane %v586, %v590
    %592 = vmatprep.subr.mxu0 0.0
    %593 = vmatpush1.msra.mxu0 %v567
    %594 = vmatprep.subr.mxu0 0.0
    %595 = vmatpush1.msra.mxu0 %v568
    %596 = vmatprep.subr.mxu0 0.0
    %597 = vmatpush1.msra.mxu0 %v569
    %598 = vmatprep.subr.mxu0 0.0
    %599 = vmatpush1.msra.mxu0 %v570
    %600 = vmatprep.subr.mxu0 0.0
    %601 = vmatpush1.msra.mxu0 %v571
    %602 = vmatprep.subr.mxu0 0.0
    %603 = vmatpush1.msra.mxu0 %v572
    %604 = vmatprep.subr.mxu0 0.0
    %605 = vmatpush1.msra.mxu0 %v573
    %606 = vmatprep.subr.mxu0 0.0
    %607 = vmatpush1.msra.mxu0 %v574
    %608 = vmatprep.subr.mxu0 0.0
    %609 = vmatpush1.msra.mxu0 %v575
    %610 = vmatprep.subr.mxu0 0.0
    %611 = vmatpush1.msra.mxu0 %v576
    %612 = vmatprep.subr.mxu0 0.0
    %613 = vmatpush1.msra.mxu0 %v577
    %614 = vmatprep.subr.mxu0 0.0
    %615 = vmatpush1.msra.mxu0 %v578
    %616 = vmatprep.subr.mxu0 0.0
    %617 = vmatpush1.msra.mxu0 %v579
    %618 = vmatprep.subr.mxu0 0.0
    %619 = vmatpush1.msra.mxu0 %v580
    %620 = vmatprep.subr.mxu0 0.0
    %621 = vmatpush1.msra.mxu0 %v581
    %622 = vmatprep.subr.mxu0 0.0
    %623 = vmatpush1.msra.mxu0 %v582
    %624 = vmatprep.subr.mxu0 0.0
    %625 = vmatpush1.msra.mxu0 0.0
    %626 = vmatprep.subr.mxu0 0.0
    %627 = vmatpush1.msra.mxu0 0.0
    %628 = vmatprep.subr.mxu0 0.0
    %629 = vmatpush1.msra.mxu0 0.0
    %630 = vmatprep.subr.mxu0 0.0
    %631 = vmatpush1.msra.mxu0 0.0
    %632 = vmatprep.subr.mxu0 0.0
    %633 = vmatpush1.msra.mxu0 0.0
    %634 = vmatprep.subr.mxu0 0.0
    %635 = vmatpush1.msra.mxu0 0.0
    %636 = vmatprep.subr.mxu0 0.0
    %637 = vmatpush1.msra.mxu0 0.0
    %638 = vmatprep.subr.mxu0 0.0
    %639 = vmatpush1.msra.mxu0 0.0
    %640 = vmatprep.subr.mxu0 0.0
    %641 = vmatpush1.msra.mxu0 0.0
    %642 = vmatprep.subr.mxu0 0.0
    %643 = vmatpush1.msra.mxu0 0.0
    %644 = vmatprep.subr.mxu0 0.0
    %645 = vmatpush1.msra.mxu0 0.0
    %646 = vmatprep.subr.mxu0 0.0
    %647 = vmatpush1.msra.mxu0 0.0
    %648 = vmatprep.subr.mxu0 0.0
    %649 = vmatpush1.msra.mxu0 0.0
    %650 = vmatprep.subr.mxu0 0.0
    %651 = vmatpush1.msra.mxu0 0.0
    %652 = vmatprep.subr.mxu0 0.0
    %653 = vmatpush1.msra.mxu0 0.0
    %654 = vmatprep.subr.mxu0 0.0
    %655 = vmatpush1.msra.mxu0 0.0
    %656 = vmatprep.mubr.f32.mxu0 0.0
    %657 = vmatmul.mubr.f32.gmra.mrb[0].mxu0 %v94
    %v658 = vpop.f32.mrb[0].mxu0
    %v659 = vadd.f32 %v591, %v658
    %v660 = vpop.f32.mrb[0].mxu0
    %661 = vdwg.mxu0
    %662 = vst [vmem:[#allocation3] sm:$0x1] %v659
    // Predicated region
    $region30: #{tpu_custom_call.1} parent=1 // pred_check
      _
    $region31: #{tpu_custom_call.1} parent=1 // pred_check_branch
      %664 = sbr.rel (0) target = $region33
    $region32: #{tpu_custom_call.1} parent=1 // pred_region
      %s666 = ssub.s32 16, 16
      %667 = vsyncadd [#allocation4], %s666
      %s669 = sshll.u32 [#allocation3], 4
      %s670 = int_to_ptr.vmem [resolvable:$true] %s669
      %672 = dma.vmem_to_hbm [thread:$0]  %s670, 16, %s7, [#allocation4]
    $region33: #{tpu_custom_call.1} parent=1 // pred_fallthru
      _
    // Predicated region
    $region34: #{tpu_custom_call.1} parent=1 // pred_check
      _
    $region35: #{tpu_custom_call.1} parent=1 // pred_check_branch
      %674 = sbr.rel (0) target = $region37
    $region36: #{tpu_custom_call.1} parent=1 // pred_region
      %675 = dma.done [#allocation4], 16
    $region37: #{tpu_custom_call.1} parent=1 // pred_fallthru
      _
    %676 = vsyncpa [#allocation4], 1

</llo_original>
